<compile_context>
chip_gen: v6e
topology: v6e:2x2x1
jax: 0.10.0
libtpu: 0.0.40
codegen_flags: <defaults>
</compile_context>

<pallas_src>
import math
from functools import partial

import jax
import jax.numpy as jnp
from jax.experimental import pallas as pl
from jax.experimental.pallas import tpu as pltpu

_LANE = 128  # TPU lane width; mode axis is padded to a multiple of this.


# --------------------------------------------------------------------------- #
# Pallas kernel: complex I->O contraction for a block of TM Fourier modes.
# --------------------------------------------------------------------------- #
def _spectral_modes_kernel(xr_ref, xi_ref, wr_ref, wi_ref, or_ref, oi_ref):
    """Block shapes (TM = modes per step, a multiple of 128 on the lane axis):
      xr_ref, xi_ref : (B, I, TM)
      wr_ref, wi_ref : (I, O, TM)
      or_ref, oi_ref : (B, O, TM)
    Complex multiply-accumulate over I, entirely on the VPU:
      out_r[b,o,m] = sum_i xr[b,i,m]*wr[i,o,m] - xi[b,i,m]*wi[i,o,m]
      out_i[b,o,m] = sum_i xi[b,i,m]*wr[i,o,m] + xr[b,i,m]*wi[i,o,m]
    """
    in_dim = wr_ref.shape[0]
    acc_r = jnp.zeros(or_ref.shape, jnp.float32)
    acc_i = jnp.zeros(oi_ref.shape, jnp.float32)
    # Static unroll over input channels (FNO-1d channel counts are small).
    for i in range(in_dim):
        xr_i = xr_ref[:, i : i + 1, :]   # (B, 1, TM)
        xi_i = xi_ref[:, i : i + 1, :]
        wr_i = wr_ref[i : i + 1, :, :]   # (1, O, TM)
        wi_i = wi_ref[i : i + 1, :, :]
        acc_r = acc_r + xr_i * wr_i - xi_i * wi_i
        acc_i = acc_i + xi_i * wr_i + xr_i * wi_i
    or_ref[...] = acc_r
    oi_ref[...] = acc_i


def _spectral_modes_pallas(xr, xi, wr, wi, tm, vmem_limit_bytes):
    """xr/xi: (B, I, M_pad) f32; wr/wi: (I, O, M_pad) f32; M_pad % tm == 0.
    Returns (out_r, out_i), each (B, O, M_pad) f32."""
    B, I, m_pad = xr.shape
    O = wr.shape[1]
    grid = (m_pad // tm,)

    flops = 8 * B * I * O * m_pad                       # 4 mul + 4 add per (b,i,o,m)
    bytes_accessed = 4 * m_pad * (2 * B * I + 2 * I * O + 2 * B * O)

    return pl.pallas_call(
        _spectral_modes_kernel,
        out_shape=(
            jax.ShapeDtypeStruct((B, O, m_pad), jnp.float32),
            jax.ShapeDtypeStruct((B, O, m_pad), jnp.float32),
        ),
        grid_spec=pltpu.PrefetchScalarGridSpec(
            num_scalar_prefetch=0,
            grid=grid,
            in_specs=[
                pl.BlockSpec((B, I, tm), lambda m: (0, 0, m)),
                pl.BlockSpec((B, I, tm), lambda m: (0, 0, m)),
                pl.BlockSpec((I, O, tm), lambda m: (0, 0, m)),
                pl.BlockSpec((I, O, tm), lambda m: (0, 0, m)),
            ],
            out_specs=[
                pl.BlockSpec((B, O, tm), lambda m: (0, 0, m)),
                pl.BlockSpec((B, O, tm), lambda m: (0, 0, m)),
            ],
        ),
        compiler_params=pltpu.CompilerParams(
            dimension_semantics=("parallel",),          # mode blocks are independent
            vmem_limit_bytes=vmem_limit_bytes,
        ),
        cost_estimate=pl.CostEstimate(
            flops=flops, transcendentals=0, bytes_accessed=bytes_accessed
        ),
    )(xr, xi, wr, wi)


# --------------------------------------------------------------------------- #
# Generation-aware VMEM budgeting / mode-block sizing.
# --------------------------------------------------------------------------- #
def _vmem_capacity_bytes():
    try:
        cap = int(pltpu.get_tpu_info().vmem_capacity_bytes)
        return max(cap, 32 * 1024 * 1024)
    except Exception:
        return 64 * 1024 * 1024  # conservative fallback (v7x per-TC physical)


def _choose_tm(B, I, O, m_pad, budget_bytes):
    """Largest mode-block (multiple of 128 dividing m_pad) whose (8,128)-padded,
    double-buffered working set fits the VMEM budget."""
    r8 = lambda v: -(-v // 8) * 8
    # f32 bytes per 128 modes (one lane tile); x2 = double buffer per pipelined spec.
    per128 = 128 * 4 * (
        2 * 2 * B * r8(I)      # xr, xi blocks
        + 2 * 2 * I * r8(O)    # wr, wi blocks
        + 2 * 2 * B * r8(O)    # out_r, out_i blocks
        + 8 * B * r8(O)        # accumulators + live temporaries (headroom)
    )
    candidates = [t for t in range(_LANE, m_pad + 1, _LANE) if m_pad % t == 0]
    fitting = [t for t in candidates if (t // _LANE) * per128 <= budget_bytes] or [_LANE]
    tm = max(fitting)
    # Prefer >= 2 grid steps when the mode axis allows it: feeds both
    # TensorCores on v7x and enables DMA/compute overlap everywhere.
    if tm == m_pad and m_pad >= 2 * _LANE:
        smaller = [t for t in fitting if t < m_pad]
        if smaller:
            tm = max(smaller)
    return int(tm)


# --------------------------------------------------------------------------- #
# Jitted forward (FFTs + slice/pad plumbing fuse around the pallas_call).
# --------------------------------------------------------------------------- #
@partial(jax.jit, static_argnames=("n_modes", "tm", "vmem_limit_bytes"))
def _spectral_conv1d_forward(x, wr, wi, n_modes, tm, vmem_limit_bytes):
    B, I, N = x.shape
    n_freq = N // 2 + 1
    m_pad = wr.shape[-1]

    x_ft = jnp.fft.rfft(x, axis=-1)                          # (B, I, n_freq) complex64
    xr = jnp.real(x_ft[:, :, :n_modes]).astype(jnp.float32)  # (B, I, n_modes) mode-last
    xi = jnp.imag(x_ft[:, :, :n_modes]).astype(jnp.float32)
    pad = m_pad - n_modes
    if pad:
        # zero-padding the modes keeps padded output modes exactly zero
        xr = jnp.pad(xr, ((0, 0), (0, 0), (0, pad)))
        xi = jnp.pad(xi, ((0, 0), (0, 0), (0, pad)))

    out_r, out_i = _spectral_modes_pallas(xr, xi, wr, wi, tm, vmem_limit_bytes)

    out_c = jax.lax.complex(out_r, out_i)                    # (B, O, m_pad) complex64
    if m_pad >= n_freq:
        out_ft = out_c[:, :, :n_freq]                        # modes >= n_modes are zero
    else:
        out_ft = jnp.pad(out_c, ((0, 0), (0, 0), (0, n_freq - m_pad)))

    return jnp.fft.irfft(out_ft, n=N, axis=-1).astype(jnp.float32)


# --------------------------------------------------------------------------- #
# Module wrapper.
# --------------------------------------------------------------------------- #
class DecomposeSpectralConv1dPallas:
    """JAX/Pallas port of DecomposeSpectralConv1d (forward semantics preserved:
    the reference's double assignment means only fourier_weight[1] matters)."""

    def __init__(self, in_dim, out_dim, n_modes, key):
        assert in_dim == out_dim, "reference module implicitly requires in_dim == out_dim"
        self.in_dim = in_dim
        self.out_dim = out_dim
        self.n_modes = n_modes

        # Matches torch.nn.init.xavier_normal_ with gain = 1/(in_dim*out_dim)
        # on a tensor of shape (in_dim, out_dim, n_modes, 2):
        #   fan_in = out_dim*n_modes*2, fan_out = in_dim*n_modes*2
        gain = 1.0 / (in_dim * out_dim)
        fan_in = out_dim * n_modes * 2
        fan_out = in_dim * n_modes * 2
        std = gain * math.sqrt(2.0 / (fan_in + fan_out))
        k0, k1 = jax.random.split(key)
        self.fourier_weight = [
            std * jax.random.normal(k0, (in_dim, out_dim, n_modes, 2), jnp.float32),
            std * jax.random.normal(k1, (in_dim, out_dim, n_modes, 2), jnp.float32),
        ]

        # Only weight[1] is live. Weight is already mode-last (I, O, M): just
        # split real/imag (no duplication, no transpose) and lane-pad the modes.
        w = self.fourier_weight[1]
        self.m_pad = pl.cdiv(n_modes, _LANE) * _LANE
        pad = self.m_pad - n_modes
        wr = w[..., 0]
        wi = w[..., 1]
        if pad:
            wr = jnp.pad(wr, ((0, 0), (0, 0), (0, pad)))
            wi = jnp.pad(wi, ((0, 0), (0, 0), (0, pad)))
        self.wr_pad = wr.astype(jnp.float32)   # (I, O, m_pad)
        self.wi_pad = wi.astype(jnp.float32)

        # Generation-aware VMEM budgeting (v5e/v6e: 128 MiB, v7x: 64 MiB per TC).
        cap = _vmem_capacity_bytes()
        self._vmem_limit_bytes = int(max(16 * 1024 * 1024, cap // 2))
        self._tm_budget_bytes = int(self._vmem_limit_bytes * 2 // 3)

    def __call__(self, x):
        B = x.shape[0]
        tm = _choose_tm(B, self.in_dim, self.out_dim, self.m_pad, self._tm_budget_bytes)
        return _spectral_conv1d_forward(
            x, self.wr_pad, self.wi_pad,
            n_modes=self.n_modes, tm=tm, vmem_limit_bytes=self._vmem_limit_bytes,
        )


# --------------------------------------------------------------------------- #
# Pure-JAX reference (mirrors the PyTorch forward; only weight[1] survives).
# --------------------------------------------------------------------------- #
def _reference_forward(x, w, n_modes):
    B, I, N = x.shape
    n_freq = N // 2 + 1
    x_ft = jnp.fft.rfft(x, axis=-1)
    a_r = jnp.real(x_ft[:, :, :n_modes])
    a_i = jnp.imag(x_ft[:, :, :n_modes])
    wr, wi = w[..., 0], w[..., 1]
    out_r = jnp.einsum("bix,iox->box", a_r, wr) - jnp.einsum("bix,iox->box", a_i, wi)
    out_i = jnp.einsum("bix,iox->box", a_i, wr) + jnp.einsum("bix,iox->box", a_r, wi)
    out_ft = jnp.zeros((B, I, n_freq), jnp.complex64).at[:, :, :n_modes].set(out_r + 1j * out_i)
    return jnp.fft.irfft(out_ft, n=N, axis=-1).astype(jnp.float32)


if __name__ == "__main__":
    key = jax.random.PRNGKey(0)
    k_w, k_x = jax.random.split(key)

    B, C, N = 2, 8, 16          # batch, channels (in_dim == out_dim), spatial
    n_modes = 6                 # <= N//2 + 1

    module = DecomposeSpectralConv1dPallas(C, C, n_modes, k_w)
    x = jax.random.normal(k_x, (B, C, N), jnp.float32)

    y = module(x)
    jax.block_until_ready(y)
    assert y.shape == (B, C, N), y.shape
    assert y.dtype == jnp.float32

    y_ref = _reference_forward(x, module.fourier_weight[1], n_modes)
    jax.block_until_ready(y_ref)
    assert jnp.allclose(y, y_ref, rtol=1e-4, atol=1e-4), float(jnp.max(jnp.abs(y - y_ref)))

    print("KERNEL_OK")
</pallas_src>

<mosaic_0001>
module attributes {stable_mosaic.version = 11 : i64} {
  func.func @_spectral_modes_kernel(%arg0: i32, %arg1: memref<2x8x128xf32, #tpu.memory_space<vmem>>, %arg2: memref<2x8x128xf32, #tpu.memory_space<vmem>>, %arg3: memref<8x8x128xf32, #tpu.memory_space<vmem>>, %arg4: memref<8x8x128xf32, #tpu.memory_space<vmem>>, %arg5: memref<2x8x128xf32, #tpu.memory_space<vmem>>, %arg6: memref<2x8x128xf32, #tpu.memory_space<vmem>>) attributes {dimension_semantics = [#tpu.dimension_semantics<parallel>], iteration_bounds = array<i64: 1>, scalar_prefetch = 0 : i64, scratch_operands = 0 : i64, tpu.core_type = #tpu.core_type<tc>, window_params = [{transform_indices = @transform_0, window_bounds = array<i64: 2, 8, 128>}, {transform_indices = @transform_1, window_bounds = array<i64: 2, 8, 128>}, {transform_indices = @transform_2, window_bounds = array<i64: 8, 8, 128>}, {transform_indices = @transform_3, window_bounds = array<i64: 8, 8, 128>}, {transform_indices = @transform_4, window_bounds = array<i64: 2, 8, 128>}, {transform_indices = @transform_5, window_bounds = array<i64: 2, 8, 128>}]} {
    %cst = arith.constant 0.000000e+00 : f32
    %0 = vector.broadcast %cst : f32 to vector<2x8x128xf32>
    %cst_0 = arith.constant 0.000000e+00 : f32
    %1 = vector.broadcast %cst_0 : f32 to vector<2x8x128xf32>
    %c0 = arith.constant 0 : index
    %c0_1 = arith.constant 0 : index
    %c0_2 = arith.constant 0 : index
    %2 = vector.load %arg1[%c0, %c0_1, %c0_2] : memref<2x8x128xf32, #tpu.memory_space<vmem>>, vector<2x1x128xf32>
    %c0_3 = arith.constant 0 : index
    %c0_4 = arith.constant 0 : index
    %c0_5 = arith.constant 0 : index
    %3 = vector.load %arg2[%c0_3, %c0_4, %c0_5] : memref<2x8x128xf32, #tpu.memory_space<vmem>>, vector<2x1x128xf32>
    %c0_6 = arith.constant 0 : index
    %c0_7 = arith.constant 0 : index
    %c0_8 = arith.constant 0 : index
    %4 = vector.load %arg3[%c0_6, %c0_7, %c0_8] : memref<8x8x128xf32, #tpu.memory_space<vmem>>, vector<1x8x128xf32>
    %c0_9 = arith.constant 0 : index
    %c0_10 = arith.constant 0 : index
    %c0_11 = arith.constant 0 : index
    %5 = vector.load %arg4[%c0_9, %c0_10, %c0_11] : memref<8x8x128xf32, #tpu.memory_space<vmem>>, vector<1x8x128xf32>
    %6 = vector.broadcast %2 : vector<2x1x128xf32> to vector<2x8x128xf32>
    %7 = vector.broadcast %4 : vector<1x8x128xf32> to vector<2x8x128xf32>
    %8 = arith.mulf %6, %7 : vector<2x8x128xf32>
    %9 = arith.addf %0, %8 : vector<2x8x128xf32>
    %10 = vector.broadcast %3 : vector<2x1x128xf32> to vector<2x8x128xf32>
    %11 = vector.broadcast %5 : vector<1x8x128xf32> to vector<2x8x128xf32>
    %12 = arith.mulf %10, %11 : vector<2x8x128xf32>
    %13 = arith.subf %9, %12 : vector<2x8x128xf32>
    %14 = vector.broadcast %3 : vector<2x1x128xf32> to vector<2x8x128xf32>
    %15 = vector.broadcast %4 : vector<1x8x128xf32> to vector<2x8x128xf32>
    %16 = arith.mulf %14, %15 : vector<2x8x128xf32>
    %17 = arith.addf %1, %16 : vector<2x8x128xf32>
    %18 = vector.broadcast %2 : vector<2x1x128xf32> to vector<2x8x128xf32>
    %19 = vector.broadcast %5 : vector<1x8x128xf32> to vector<2x8x128xf32>
    %20 = arith.mulf %18, %19 : vector<2x8x128xf32>
    %21 = arith.addf %17, %20 : vector<2x8x128xf32>
    %c0_12 = arith.constant 0 : index
    %c1 = arith.constant 1 : index
    %c0_13 = arith.constant 0 : index
    %22 = vector.load %arg1[%c0_12, %c1, %c0_13] : memref<2x8x128xf32, #tpu.memory_space<vmem>>, vector<2x1x128xf32>
    %c0_14 = arith.constant 0 : index
    %c1_15 = arith.constant 1 : index
    %c0_16 = arith.constant 0 : index
    %23 = vector.load %arg2[%c0_14, %c1_15, %c0_16] : memref<2x8x128xf32, #tpu.memory_space<vmem>>, vector<2x1x128xf32>
    %c1_17 = arith.constant 1 : index
    %c0_18 = arith.constant 0 : index
    %c0_19 = arith.constant 0 : index
    %24 = vector.load %arg3[%c1_17, %c0_18, %c0_19] : memref<8x8x128xf32, #tpu.memory_space<vmem>>, vector<1x8x128xf32>
    %c1_20 = arith.constant 1 : index
    %c0_21 = arith.constant 0 : index
    %c0_22 = arith.constant 0 : index
    %25 = vector.load %arg4[%c1_20, %c0_21, %c0_22] : memref<8x8x128xf32, #tpu.memory_space<vmem>>, vector<1x8x128xf32>
    %26 = vector.broadcast %22 : vector<2x1x128xf32> to vector<2x8x128xf32>
    %27 = vector.broadcast %24 : vector<1x8x128xf32> to vector<2x8x128xf32>
    %28 = arith.mulf %26, %27 : vector<2x8x128xf32>
    %29 = arith.addf %13, %28 : vector<2x8x128xf32>
    %30 = vector.broadcast %23 : vector<2x1x128xf32> to vector<2x8x128xf32>
    %31 = vector.broadcast %25 : vector<1x8x128xf32> to vector<2x8x128xf32>
    %32 = arith.mulf %30, %31 : vector<2x8x128xf32>
    %33 = arith.subf %29, %32 : vector<2x8x128xf32>
    %34 = vector.broadcast %23 : vector<2x1x128xf32> to vector<2x8x128xf32>
    %35 = vector.broadcast %24 : vector<1x8x128xf32> to vector<2x8x128xf32>
    %36 = arith.mulf %34, %35 : vector<2x8x128xf32>
    %37 = arith.addf %21, %36 : vector<2x8x128xf32>
    %38 = vector.broadcast %22 : vector<2x1x128xf32> to vector<2x8x128xf32>
    %39 = vector.broadcast %25 : vector<1x8x128xf32> to vector<2x8x128xf32>
    %40 = arith.mulf %38, %39 : vector<2x8x128xf32>
    %41 = arith.addf %37, %40 : vector<2x8x128xf32>
    %c0_23 = arith.constant 0 : index
    %c2 = arith.constant 2 : index
    %c0_24 = arith.constant 0 : index
    %42 = vector.load %arg1[%c0_23, %c2, %c0_24] : memref<2x8x128xf32, #tpu.memory_space<vmem>>, vector<2x1x128xf32>
    %c0_25 = arith.constant 0 : index
    %c2_26 = arith.constant 2 : index
    %c0_27 = arith.constant 0 : index
    %43 = vector.load %arg2[%c0_25, %c2_26, %c0_27] : memref<2x8x128xf32, #tpu.memory_space<vmem>>, vector<2x1x128xf32>
    %c2_28 = arith.constant 2 : index
    %c0_29 = arith.constant 0 : index
    %c0_30 = arith.constant 0 : index
    %44 = vector.load %arg3[%c2_28, %c0_29, %c0_30] : memref<8x8x128xf32, #tpu.memory_space<vmem>>, vector<1x8x128xf32>
    %c2_31 = arith.constant 2 : index
    %c0_32 = arith.constant 0 : index
    %c0_33 = arith.constant 0 : index
    %45 = vector.load %arg4[%c2_31, %c0_32, %c0_33] : memref<8x8x128xf32, #tpu.memory_space<vmem>>, vector<1x8x128xf32>
    %46 = vector.broadcast %42 : vector<2x1x128xf32> to vector<2x8x128xf32>
    %47 = vector.broadcast %44 : vector<1x8x128xf32> to vector<2x8x128xf32>
    %48 = arith.mulf %46, %47 : vector<2x8x128xf32>
    %49 = arith.addf %33, %48 : vector<2x8x128xf32>
    %50 = vector.broadcast %43 : vector<2x1x128xf32> to vector<2x8x128xf32>
    %51 = vector.broadcast %45 : vector<1x8x128xf32> to vector<2x8x128xf32>
    %52 = arith.mulf %50, %51 : vector<2x8x128xf32>
    %53 = arith.subf %49, %52 : vector<2x8x128xf32>
    %54 = vector.broadcast %43 : vector<2x1x128xf32> to vector<2x8x128xf32>
    %55 = vector.broadcast %44 : vector<1x8x128xf32> to vector<2x8x128xf32>
    %56 = arith.mulf %54, %55 : vector<2x8x128xf32>
    %57 = arith.addf %41, %56 : vector<2x8x128xf32>
    %58 = vector.broadcast %42 : vector<2x1x128xf32> to vector<2x8x128xf32>
    %59 = vector.broadcast %45 : vector<1x8x128xf32> to vector<2x8x128xf32>
    %60 = arith.mulf %58, %59 : vector<2x8x128xf32>
    %61 = arith.addf %57, %60 : vector<2x8x128xf32>
    %c0_34 = arith.constant 0 : index
    %c3 = arith.constant 3 : index
    %c0_35 = arith.constant 0 : index
    %62 = vector.load %arg1[%c0_34, %c3, %c0_35] : memref<2x8x128xf32, #tpu.memory_space<vmem>>, vector<2x1x128xf32>
    %c0_36 = arith.constant 0 : index
    %c3_37 = arith.constant 3 : index
    %c0_38 = arith.constant 0 : index
    %63 = vector.load %arg2[%c0_36, %c3_37, %c0_38] : memref<2x8x128xf32, #tpu.memory_space<vmem>>, vector<2x1x128xf32>
    %c3_39 = arith.constant 3 : index
    %c0_40 = arith.constant 0 : index
    %c0_41 = arith.constant 0 : index
    %64 = vector.load %arg3[%c3_39, %c0_40, %c0_41] : memref<8x8x128xf32, #tpu.memory_space<vmem>>, vector<1x8x128xf32>
    %c3_42 = arith.constant 3 : index
    %c0_43 = arith.constant 0 : index
    %c0_44 = arith.constant 0 : index
    %65 = vector.load %arg4[%c3_42, %c0_43, %c0_44] : memref<8x8x128xf32, #tpu.memory_space<vmem>>, vector<1x8x128xf32>
    %66 = vector.broadcast %62 : vector<2x1x128xf32> to vector<2x8x128xf32>
    %67 = vector.broadcast %64 : vector<1x8x128xf32> to vector<2x8x128xf32>
    %68 = arith.mulf %66, %67 : vector<2x8x128xf32>
    %69 = arith.addf %53, %68 : vector<2x8x128xf32>
    %70 = vector.broadcast %63 : vector<2x1x128xf32> to vector<2x8x128xf32>
    %71 = vector.broadcast %65 : vector<1x8x128xf32> to vector<2x8x128xf32>
    %72 = arith.mulf %70, %71 : vector<2x8x128xf32>
    %73 = arith.subf %69, %72 : vector<2x8x128xf32>
    %74 = vector.broadcast %63 : vector<2x1x128xf32> to vector<2x8x128xf32>
    %75 = vector.broadcast %64 : vector<1x8x128xf32> to vector<2x8x128xf32>
    %76 = arith.mulf %74, %75 : vector<2x8x128xf32>
    %77 = arith.addf %61, %76 : vector<2x8x128xf32>
    %78 = vector.broadcast %62 : vector<2x1x128xf32> to vector<2x8x128xf32>
    %79 = vector.broadcast %65 : vector<1x8x128xf32> to vector<2x8x128xf32>
    %80 = arith.mulf %78, %79 : vector<2x8x128xf32>
    %81 = arith.addf %77, %80 : vector<2x8x128xf32>
    %c0_45 = arith.constant 0 : index
    %c4 = arith.constant 4 : index
    %c0_46 = arith.constant 0 : index
    %82 = vector.load %arg1[%c0_45, %c4, %c0_46] : memref<2x8x128xf32, #tpu.memory_space<vmem>>, vector<2x1x128xf32>
    %c0_47 = arith.constant 0 : index
    %c4_48 = arith.constant 4 : index
    %c0_49 = arith.constant 0 : index
    %83 = vector.load %arg2[%c0_47, %c4_48, %c0_49] : memref<2x8x128xf32, #tpu.memory_space<vmem>>, vector<2x1x128xf32>
    %c4_50 = arith.constant 4 : index
    %c0_51 = arith.constant 0 : index
    %c0_52 = arith.constant 0 : index
    %84 = vector.load %arg3[%c4_50, %c0_51, %c0_52] : memref<8x8x128xf32, #tpu.memory_space<vmem>>, vector<1x8x128xf32>
    %c4_53 = arith.constant 4 : index
    %c0_54 = arith.constant 0 : index
    %c0_55 = arith.constant 0 : index
    %85 = vector.load %arg4[%c4_53, %c0_54, %c0_55] : memref<8x8x128xf32, #tpu.memory_space<vmem>>, vector<1x8x128xf32>
    %86 = vector.broadcast %82 : vector<2x1x128xf32> to vector<2x8x128xf32>
    %87 = vector.broadcast %84 : vector<1x8x128xf32> to vector<2x8x128xf32>
    %88 = arith.mulf %86, %87 : vector<2x8x128xf32>
    %89 = arith.addf %73, %88 : vector<2x8x128xf32>
    %90 = vector.broadcast %83 : vector<2x1x128xf32> to vector<2x8x128xf32>
    %91 = vector.broadcast %85 : vector<1x8x128xf32> to vector<2x8x128xf32>
    %92 = arith.mulf %90, %91 : vector<2x8x128xf32>
    %93 = arith.subf %89, %92 : vector<2x8x128xf32>
    %94 = vector.broadcast %83 : vector<2x1x128xf32> to vector<2x8x128xf32>
    %95 = vector.broadcast %84 : vector<1x8x128xf32> to vector<2x8x128xf32>
    %96 = arith.mulf %94, %95 : vector<2x8x128xf32>
    %97 = arith.addf %81, %96 : vector<2x8x128xf32>
    %98 = vector.broadcast %82 : vector<2x1x128xf32> to vector<2x8x128xf32>
    %99 = vector.broadcast %85 : vector<1x8x128xf32> to vector<2x8x128xf32>
    %100 = arith.mulf %98, %99 : vector<2x8x128xf32>
    %101 = arith.addf %97, %100 : vector<2x8x128xf32>
    %c0_56 = arith.constant 0 : index
    %c5 = arith.constant 5 : index
    %c0_57 = arith.constant 0 : index
    %102 = vector.load %arg1[%c0_56, %c5, %c0_57] : memref<2x8x128xf32, #tpu.memory_space<vmem>>, vector<2x1x128xf32>
    %c0_58 = arith.constant 0 : index
    %c5_59 = arith.constant 5 : index
    %c0_60 = arith.constant 0 : index
    %103 = vector.load %arg2[%c0_58, %c5_59, %c0_60] : memref<2x8x128xf32, #tpu.memory_space<vmem>>, vector<2x1x128xf32>
    %c5_61 = arith.constant 5 : index
    %c0_62 = arith.constant 0 : index
    %c0_63 = arith.constant 0 : index
    %104 = vector.load %arg3[%c5_61, %c0_62, %c0_63] : memref<8x8x128xf32, #tpu.memory_space<vmem>>, vector<1x8x128xf32>
    %c5_64 = arith.constant 5 : index
    %c0_65 = arith.constant 0 : index
    %c0_66 = arith.constant 0 : index
    %105 = vector.load %arg4[%c5_64, %c0_65, %c0_66] : memref<8x8x128xf32, #tpu.memory_space<vmem>>, vector<1x8x128xf32>
    %106 = vector.broadcast %102 : vector<2x1x128xf32> to vector<2x8x128xf32>
    %107 = vector.broadcast %104 : vector<1x8x128xf32> to vector<2x8x128xf32>
    %108 = arith.mulf %106, %107 : vector<2x8x128xf32>
    %109 = arith.addf %93, %108 : vector<2x8x128xf32>
    %110 = vector.broadcast %103 : vector<2x1x128xf32> to vector<2x8x128xf32>
    %111 = vector.broadcast %105 : vector<1x8x128xf32> to vector<2x8x128xf32>
    %112 = arith.mulf %110, %111 : vector<2x8x128xf32>
    %113 = arith.subf %109, %112 : vector<2x8x128xf32>
    %114 = vector.broadcast %103 : vector<2x1x128xf32> to vector<2x8x128xf32>
    %115 = vector.broadcast %104 : vector<1x8x128xf32> to vector<2x8x128xf32>
    %116 = arith.mulf %114, %115 : vector<2x8x128xf32>
    %117 = arith.addf %101, %116 : vector<2x8x128xf32>
    %118 = vector.broadcast %102 : vector<2x1x128xf32> to vector<2x8x128xf32>
    %119 = vector.broadcast %105 : vector<1x8x128xf32> to vector<2x8x128xf32>
    %120 = arith.mulf %118, %119 : vector<2x8x128xf32>
    %121 = arith.addf %117, %120 : vector<2x8x128xf32>
    %c0_67 = arith.constant 0 : index
    %c6 = arith.constant 6 : index
    %c0_68 = arith.constant 0 : index
    %122 = vector.load %arg1[%c0_67, %c6, %c0_68] : memref<2x8x128xf32, #tpu.memory_space<vmem>>, vector<2x1x128xf32>
    %c0_69 = arith.constant 0 : index
    %c6_70 = arith.constant 6 : index
    %c0_71 = arith.constant 0 : index
    %123 = vector.load %arg2[%c0_69, %c6_70, %c0_71] : memref<2x8x128xf32, #tpu.memory_space<vmem>>, vector<2x1x128xf32>
    %c6_72 = arith.constant 6 : index
    %c0_73 = arith.constant 0 : index
    %c0_74 = arith.constant 0 : index
    %124 = vector.load %arg3[%c6_72, %c0_73, %c0_74] : memref<8x8x128xf32, #tpu.memory_space<vmem>>, vector<1x8x128xf32>
    %c6_75 = arith.constant 6 : index
    %c0_76 = arith.constant 0 : index
    %c0_77 = arith.constant 0 : index
    %125 = vector.load %arg4[%c6_75, %c0_76, %c0_77] : memref<8x8x128xf32, #tpu.memory_space<vmem>>, vector<1x8x128xf32>
    %126 = vector.broadcast %122 : vector<2x1x128xf32> to vector<2x8x128xf32>
    %127 = vector.broadcast %124 : vector<1x8x128xf32> to vector<2x8x128xf32>
    %128 = arith.mulf %126, %127 : vector<2x8x128xf32>
    %129 = arith.addf %113, %128 : vector<2x8x128xf32>
    %130 = vector.broadcast %123 : vector<2x1x128xf32> to vector<2x8x128xf32>
    %131 = vector.broadcast %125 : vector<1x8x128xf32> to vector<2x8x128xf32>
    %132 = arith.mulf %130, %131 : vector<2x8x128xf32>
    %133 = arith.subf %129, %132 : vector<2x8x128xf32>
    %134 = vector.broadcast %123 : vector<2x1x128xf32> to vector<2x8x128xf32>
    %135 = vector.broadcast %124 : vector<1x8x128xf32> to vector<2x8x128xf32>
    %136 = arith.mulf %134, %135 : vector<2x8x128xf32>
    %137 = arith.addf %121, %136 : vector<2x8x128xf32>
    %138 = vector.broadcast %122 : vector<2x1x128xf32> to vector<2x8x128xf32>
    %139 = vector.broadcast %125 : vector<1x8x128xf32> to vector<2x8x128xf32>
    %140 = arith.mulf %138, %139 : vector<2x8x128xf32>
    %141 = arith.addf %137, %140 : vector<2x8x128xf32>
    %c0_78 = arith.constant 0 : index
    %c7 = arith.constant 7 : index
    %c0_79 = arith.constant 0 : index
    %142 = vector.load %arg1[%c0_78, %c7, %c0_79] : memref<2x8x128xf32, #tpu.memory_space<vmem>>, vector<2x1x128xf32>
    %c0_80 = arith.constant 0 : index
    %c7_81 = arith.constant 7 : index
    %c0_82 = arith.constant 0 : index
    %143 = vector.load %arg2[%c0_80, %c7_81, %c0_82] : memref<2x8x128xf32, #tpu.memory_space<vmem>>, vector<2x1x128xf32>
    %c7_83 = arith.constant 7 : index
    %c0_84 = arith.constant 0 : index
    %c0_85 = arith.constant 0 : index
    %144 = vector.load %arg3[%c7_83, %c0_84, %c0_85] : memref<8x8x128xf32, #tpu.memory_space<vmem>>, vector<1x8x128xf32>
    %c7_86 = arith.constant 7 : index
    %c0_87 = arith.constant 0 : index
    %c0_88 = arith.constant 0 : index
    %145 = vector.load %arg4[%c7_86, %c0_87, %c0_88] : memref<8x8x128xf32, #tpu.memory_space<vmem>>, vector<1x8x128xf32>
    %146 = vector.broadcast %142 : vector<2x1x128xf32> to vector<2x8x128xf32>
    %147 = vector.broadcast %144 : vector<1x8x128xf32> to vector<2x8x128xf32>
    %148 = arith.mulf %146, %147 : vector<2x8x128xf32>
    %149 = arith.addf %133, %148 : vector<2x8x128xf32>
    %150 = vector.broadcast %143 : vector<2x1x128xf32> to vector<2x8x128xf32>
    %151 = vector.broadcast %145 : vector<1x8x128xf32> to vector<2x8x128xf32>
    %152 = arith.mulf %150, %151 : vector<2x8x128xf32>
    %153 = arith.subf %149, %152 : vector<2x8x128xf32>
    %154 = vector.broadcast %143 : vector<2x1x128xf32> to vector<2x8x128xf32>
    %155 = vector.broadcast %144 : vector<1x8x128xf32> to vector<2x8x128xf32>
    %156 = arith.mulf %154, %155 : vector<2x8x128xf32>
    %157 = arith.addf %141, %156 : vector<2x8x128xf32>
    %158 = vector.broadcast %142 : vector<2x1x128xf32> to vector<2x8x128xf32>
    %159 = vector.broadcast %145 : vector<1x8x128xf32> to vector<2x8x128xf32>
    %160 = arith.mulf %158, %159 : vector<2x8x128xf32>
    %161 = arith.addf %157, %160 : vector<2x8x128xf32>
    %c0_89 = arith.constant 0 : index
    %c0_90 = arith.constant 0 : index
    %c0_91 = arith.constant 0 : index
    %162 = vector.load %arg5[%c0_89, %c0_90, %c0_91] : memref<2x8x128xf32, #tpu.memory_space<vmem>>, vector<2x8x128xf32>
    tpu.vector_store %arg5[%c0_89, %c0_90, %c0_91], %153 {strides = array<i32>} : memref<2x8x128xf32, #tpu.memory_space<vmem>>, vector<2x8x128xf32>,
    %c0_92 = arith.constant 0 : index
    %c0_93 = arith.constant 0 : index
    %c0_94 = arith.constant 0 : index
    %163 = vector.load %arg6[%c0_92, %c0_93, %c0_94] : memref<2x8x128xf32, #tpu.memory_space<vmem>>, vector<2x8x128xf32>
    tpu.vector_store %arg6[%c0_92, %c0_93, %c0_94], %161 {strides = array<i32>} : memref<2x8x128xf32, #tpu.memory_space<vmem>>, vector<2x8x128xf32>,
    return
  }
  func.func @transform_0(%arg0: i32) -> (i32, i32, i32) {
    %c0_i32 = arith.constant 0 : i32
    %c0_i32_0 = arith.constant 0 : i32
    %c0_i32_1 = arith.constant 0 : i32
    return %c0_i32, %c0_i32_0, %arg0 : i32, i32, i32
  }
  func.func @transform_1(%arg0: i32) -> (i32, i32, i32) {
    %c0_i32 = arith.constant 0 : i32
    %c0_i32_0 = arith.constant 0 : i32
    %c0_i32_1 = arith.constant 0 : i32
    return %c0_i32, %c0_i32_0, %arg0 : i32, i32, i32
  }
  func.func @transform_2(%arg0: i32) -> (i32, i32, i32) {
    %c0_i32 = arith.constant 0 : i32
    %c0_i32_0 = arith.constant 0 : i32
    %c0_i32_1 = arith.constant 0 : i32
    return %c0_i32, %c0_i32_0, %arg0 : i32, i32, i32
  }
  func.func @transform_3(%arg0: i32) -> (i32, i32, i32) {
    %c0_i32 = arith.constant 0 : i32
    %c0_i32_0 = arith.constant 0 : i32
    %c0_i32_1 = arith.constant 0 : i32
    return %c0_i32, %c0_i32_0, %arg0 : i32, i32, i32
  }
  func.func @transform_4(%arg0: i32) -> (i32, i32, i32) {
    %c0_i32 = arith.constant 0 : i32
    %c0_i32_0 = arith.constant 0 : i32
    %c0_i32_1 = arith.constant 0 : i32
    return %c0_i32, %c0_i32_0, %arg0 : i32, i32, i32
  }
  func.func @transform_5(%arg0: i32) -> (i32, i32, i32) {
    %c0_i32 = arith.constant 0 : i32
    %c0_i32_0 = arith.constant 0 : i32
    %c0_i32_1 = arith.constant 0 : i32
    return %c0_i32, %c0_i32_0, %arg0 : i32, i32, i32
  }
}

</mosaic_0001>

<llo_original>
// kernel: reverse.1
$region0: #{reverse.1}
  %s0 = inlined_call_operand.vmem [shape: f32[2,8,7], index: 0, kind: input, shape index: {}]
  %s1 = inlined_call_operand.vmem [shape: f32[2,8,7], index: 1, kind: output, shape index: {}]
  %v2 = vlaneseq
  %v3 = vsub.s32 6, %v2
  %4 = vset.pattern.permute.xlu0 %v3
  $region1: #{reverse.1} parent=0
    #allocation0 [shape = 'u8[8192]{0}', space=vmem, size = 0x2000, scoped, tag = 'operand span for operand 0']
    #allocation1 [shape = 'u8[8192]{0}', space=vmem, size = 0x2000, scoped, tag = 'operand span for operand 1']
    // Predicated region
    $region2: #{reverse.1} parent=1 // pred_check
      _
    $region3: #{reverse.1} parent=1 // pred_check_branch
      %6 = sbr.rel (0) target = $region5
    $region4: #{reverse.1} parent=1 // pred_region
      // Predicated region
      $region6: #{reverse.1} parent=4 // pred_check
        _
      $region7: #{reverse.1} parent=4 // pred_check_branch
        %8 = sbr.rel (0) target = $region9
      $region8: #{reverse.1} parent=4 // pred_region
        // Predicated region
        $region21: #{reverse.1} parent=8 // pred_check
          _
        $region22: #{reverse.1} parent=8 // pred_check_branch
          %26 = sbr.rel (0) target = $region24
        $region23: #{reverse.1} parent=8 // pred_region
          loop: start=0, step=1, limit=1
          $region25: #{reverse.1} parent=23 // loop_pre_header
            _
          $region26: #{reverse.1} parent=23 // loop_header
            %s28 = sphi 0, %s32
            %p29 = scmp.ge.s32.totalorder %s28, 1
            %s33 = sphi %s0, %s0
            %s34 = sphi [#allocation0], [#allocation0]
          $region27: #{reverse.1} parent=23 // loop_header_branch
            %31 = sbr.rel (%p29) target = $region31
          $region28: #{reverse.1} parent=23 // loop_body
            %v35 = vld [vmem:[%s33] sm:$0xff]
            %36 = vst [vmem:[%s34] sm:$0xff] %v35
            %v37 = vld [vmem:[%s33 + $0x8] sm:$0xff]
            %38 = vst [vmem:[%s34 + $0x8] sm:$0xff] %v37
          $region29: #{reverse.1} parent=23 // loop_footer
            %s32 = sadd.s32 1, %s28
          $region30: #{reverse.1} parent=23 // loop_footer_branch
            %27 = sbr.rel target = $region26
          $region31: #{reverse.1} parent=23 // loop_exit
            _
        $region24: #{reverse.1} parent=8 // pred_fallthru
          _
        // Predicated region
        $region32: #{reverse.1} parent=8 // pred_check
          _
        $region33: #{reverse.1} parent=8 // pred_check_branch
          %40 = sbr.rel target = $region35
        $region34: #{reverse.1} parent=8 // pred_region
          _
        $region35: #{reverse.1} parent=8 // pred_fallthru
          _
      $region9: #{reverse.1} parent=4 // pred_fallthru
        _
      // Predicated region
      $region10: #{reverse.1} parent=4 // pred_check
        _
      $region11: #{reverse.1} parent=4 // pred_check_branch
        %10 = sbr.rel target = $region13
      $region12: #{reverse.1} parent=4 // pred_region
        %s12 = ssub.s32 256, 1
        loop: start=0, step=1, limit=1
        $region14: #{reverse.1} parent=12 // loop_pre_header
          _
        $region15: #{reverse.1} parent=12 // loop_header
          %s14 = sphi 0, %s18
          %p15 = scmp.ge.s32.totalorder %s14, 1
          %s19 = sphi %s0, %s0
          %s20 = sphi [#allocation0], [#allocation0]
        $region16: #{reverse.1} parent=12 // loop_header_branch
          %17 = sbr.rel (%p15) target = $region20
        $region17: #{reverse.1} parent=12 // loop_body
          %v21 = vld [vmem:[%s19] sm:%s12]
          %22 = vst [vmem:[%s20] sm:%s12] %v21
          %v23 = vld [vmem:[%s19 + $0x8] sm:%s12]
          %24 = vst [vmem:[%s20 + $0x8] sm:%s12] %v23
        $region18: #{reverse.1} parent=12 // loop_footer
          %s18 = sadd.s32 1, %s14
        $region19: #{reverse.1} parent=12 // loop_footer_branch
          %13 = sbr.rel target = $region15
        $region20: #{reverse.1} parent=12 // loop_exit
          _
      $region13: #{reverse.1} parent=4 // pred_fallthru
        _
    $region5: #{reverse.1} parent=1 // pred_fallthru
      _
    %41 = vnop
    %v42 = vld [vmem:[#allocation0] sm:$0xff]
    %43 = vperm.xlu0 %4, %v42
    %v44 = vpop.permute.xlu0 %43
    %45 = vst [vmem:[#allocation1] sm:$0xff] %v44
    %s46 = scalar_lea.vmem [#allocation1], 8
    %s47 = scalar_lea.vmem [#allocation0], 8
    %v48 = vld [vmem:[%s47] sm:$0xff]
    %49 = vperm.xlu0 %4, %v48
    %v50 = vpop.permute.xlu0 %49
    %51 = vst [vmem:[%s46] sm:$0xff] %v50
    // Predicated region
    $region36: #{reverse.1} parent=1 // pred_check
      _
    $region37: #{reverse.1} parent=1 // pred_check_branch
      %53 = sbr.rel (0) target = $region39
    $region38: #{reverse.1} parent=1 // pred_region
      // Predicated region
      $region40: #{reverse.1} parent=38 // pred_check
        _
      $region41: #{reverse.1} parent=38 // pred_check_branch
        %55 = sbr.rel (0) target = $region43
      $region42: #{reverse.1} parent=38 // pred_region
        // Predicated region
        $region55: #{reverse.1} parent=42 // pred_check
          _
        $region56: #{reverse.1} parent=42 // pred_check_branch
          %73 = sbr.rel (0) target = $region58
        $region57: #{reverse.1} parent=42 // pred_region
          loop: start=0, step=1, limit=1
          $region59: #{reverse.1} parent=57 // loop_pre_header
            _
          $region60: #{reverse.1} parent=57 // loop_header
            %s75 = sphi 0, %s79
            %p76 = scmp.ge.s32.totalorder %s75, 1
            %s80 = sphi [#allocation1], [#allocation1]
            %s81 = sphi %s1, %s1
          $region61: #{reverse.1} parent=57 // loop_header_branch
            %78 = sbr.rel (%p76) target = $region65
          $region62: #{reverse.1} parent=57 // loop_body
            %v82 = vld [vmem:[%s80] sm:$0xff]
            %83 = vst [vmem:[%s81] sm:$0xff] %v82
            %v84 = vld [vmem:[%s80 + $0x8] sm:$0xff]
            %85 = vst [vmem:[%s81 + $0x8] sm:$0xff] %v84
          $region63: #{reverse.1} parent=57 // loop_footer
            %s79 = sadd.s32 1, %s75
          $region64: #{reverse.1} parent=57 // loop_footer_branch
            %74 = sbr.rel target = $region60
          $region65: #{reverse.1} parent=57 // loop_exit
            _
        $region58: #{reverse.1} parent=42 // pred_fallthru
          _
        // Predicated region
        $region66: #{reverse.1} parent=42 // pred_check
          _
        $region67: #{reverse.1} parent=42 // pred_check_branch
          %87 = sbr.rel target = $region69
        $region68: #{reverse.1} parent=42 // pred_region
          _
        $region69: #{reverse.1} parent=42 // pred_fallthru
          _
      $region43: #{reverse.1} parent=38 // pred_fallthru
        _
      // Predicated region
      $region44: #{reverse.1} parent=38 // pred_check
        _
      $region45: #{reverse.1} parent=38 // pred_check_branch
        %57 = sbr.rel target = $region47
      $region46: #{reverse.1} parent=38 // pred_region
        %s59 = ssub.s32 256, 1
        loop: start=0, step=1, limit=1
        $region48: #{reverse.1} parent=46 // loop_pre_header
          _
        $region49: #{reverse.1} parent=46 // loop_header
          %s61 = sphi 0, %s65
          %p62 = scmp.ge.s32.totalorder %s61, 1
          %s66 = sphi [#allocation1], [#allocation1]
          %s67 = sphi %s1, %s1
        $region50: #{reverse.1} parent=46 // loop_header_branch
          %64 = sbr.rel (%p62) target = $region54
        $region51: #{reverse.1} parent=46 // loop_body
          %v68 = vld [vmem:[%s66] sm:%s59]
          %69 = vst [vmem:[%s67] sm:%s59] %v68
          %v70 = vld [vmem:[%s66 + $0x8] sm:%s59]
          %71 = vst [vmem:[%s67 + $0x8] sm:%s59] %v70
        $region52: #{reverse.1} parent=46 // loop_footer
          %s65 = sadd.s32 1, %s61
        $region53: #{reverse.1} parent=46 // loop_footer_branch
          %60 = sbr.rel target = $region49
        $region54: #{reverse.1} parent=46 // loop_exit
          _
      $region47: #{reverse.1} parent=38 // pred_fallthru
        _
    $region39: #{reverse.1} parent=1 // pred_fallthru
      _
    %88 = vnop

// kernel: _spectral_conv1d_forward.1
$region0: #{_spectral_conv1d_forward.1}
  #allocation0 [shape = 'u32[]', space=smem, size = 0x4, offset = 0x4, fixed_abs, tag = 'smem constant byte address 0x4 - core index']
  #allocation1 [shape = 'u32[144,128]{1,0:T(1,128)}', space=vmem, size = 0x12000, scoped, tag = 'internal scratch']
  %s0 = inlined_call_operand.vmem [shape: f32[2,8,128], index: 0, kind: input, shape index: {}]
  %s1 = inlined_call_operand.vmem [shape: f32[2,8,128], index: 1, kind: input, shape index: {}]
  %s2 = inlined_call_operand.vmem [shape: f32[8,8,128], index: 2, kind: input, shape index: {}]
  %s3 = inlined_call_operand.vmem [shape: f32[8,8,128], index: 3, kind: input, shape index: {}]
  %s4 = inlined_call_operand.vmem [shape: f32[2,8,128], index: 4, kind: output, shape index: {0}]
  %s5 = inlined_call_operand.vmem [shape: f32[2,8,128], index: 5, kind: output, shape index: {1}]
  %6 = xla_tuple %s4, %s5
  %s7 = sld [smem:[#allocation0]]
  $region34: #{_spectral_conv1d_forward.1} parent=0
    _
  %s9 = ssub.s32 1, %s7
  %s10 = scalar_select 0, %s9, %s7
  // Predicated region
  $region2: #{_spectral_conv1d_forward.1} parent=0 // pred_check
    _
  $region3: #{_spectral_conv1d_forward.1} parent=0 // pred_check_branch
    %12 = sbr.rel (0) target = $region5
  $region4: #{_spectral_conv1d_forward.1} parent=0 // pred_region
    _
  $region5: #{_spectral_conv1d_forward.1} parent=0 // pred_fallthru
    _
  // Predicated region
  $region6: #{_spectral_conv1d_forward.1} parent=0 // pred_check
    _
  $region7: #{_spectral_conv1d_forward.1} parent=0 // pred_check_branch
    %14 = sbr.rel (0) target = $region9
  $region8: #{_spectral_conv1d_forward.1} parent=0 // pred_region
    _
  $region9: #{_spectral_conv1d_forward.1} parent=0 // pred_fallthru
    _
  // Predicated region
  $region10: #{_spectral_conv1d_forward.1} parent=0 // pred_check
    _
  $region11: #{_spectral_conv1d_forward.1} parent=0 // pred_check_branch
    %16 = sbr.rel (0) target = $region13
  $region12: #{_spectral_conv1d_forward.1} parent=0 // pred_region
    _
  $region13: #{_spectral_conv1d_forward.1} parent=0 // pred_fallthru
    _
  // Predicated region
  $region14: #{_spectral_conv1d_forward.1} parent=0 // pred_check
    _
  $region15: #{_spectral_conv1d_forward.1} parent=0 // pred_check_branch
    %18 = sbr.rel (0) target = $region17
  $region16: #{_spectral_conv1d_forward.1} parent=0 // pred_region
    _
  $region17: #{_spectral_conv1d_forward.1} parent=0 // pred_fallthru
    _
  %v19 = vld [vmem:[%s0] sm:$0x1]
  %v20 = vld [vmem:[%s0 + $0x8] sm:$0x1]
  %v21 = vld [vmem:[%s1] sm:$0x1]
  %v22 = vld [vmem:[%s1 + $0x8] sm:$0x1]
  %v23 = vld [vmem:[%s2] sm:$0xff]
  %v24 = vld [vmem:[%s3] sm:$0xff]
  %v25 = vlaneseq
  %v26 = vshrl.u32 %v25, 7
  %v27 = vsub.s32 0, %v26
  %v28 = vrot.slane %v19, %v27
  %v29 = vlaneseq
  %v30 = vshrl.u32 %v29, 7
  %v31 = vsub.s32 0, %v30
  %v32 = vrot.slane %v20, %v31
  %v33 = vmul.f32 %v28, %v23
  %v34 = vmul.f32 %v32, %v23
  %v35 = vadd.f32 %v33, 0.0
  %v36 = vadd.f32 %v34, 0.0
  %v37 = vlaneseq
  %v38 = vshrl.u32 %v37, 7
  %v39 = vsub.s32 0, %v38
  %v40 = vrot.slane %v21, %v39
  %v41 = vlaneseq
  %v42 = vshrl.u32 %v41, 7
  %v43 = vsub.s32 0, %v42
  %v44 = vrot.slane %v22, %v43
  %v45 = vmul.f32 %v40, %v24
  %v46 = vmul.f32 %v44, %v24
  %v47 = vsub.f32 %v35, %v45
  %v48 = vsub.f32 %v36, %v46
  %v49 = vmul.f32 %v40, %v23
  %v50 = vmul.f32 %v44, %v23
  %v51 = vadd.f32 %v49, 0.0
  %v52 = vadd.f32 %v50, 0.0
  %v53 = vmul.f32 %v28, %v24
  %v54 = vmul.f32 %v32, %v24
  %v55 = vadd.f32 %v51, %v53
  %v56 = vadd.f32 %v52, %v54
  %v57 = vld [vmem:[%s0 + $0x1] sm:$0x1]
  %v58 = vld [vmem:[%s0 + $0x9] sm:$0x1]
  %v59 = vld [vmem:[%s1 + $0x1] sm:$0x1]
  %v60 = vld [vmem:[%s1 + $0x9] sm:$0x1]
  %s61 = scalar_lea.vmem %s2, 8
  %v62 = vld [vmem:[%s61] sm:$0xff]
  %s63 = scalar_lea.vmem %s3, 8
  %v64 = vld [vmem:[%s63] sm:$0xff]
  %v65 = vlaneseq
  %v66 = vshrl.u32 %v65, 7
  %v67 = vsub.s32 0, %v66
  %v68 = vrot.slane %v57, %v67
  %v69 = vlaneseq
  %v70 = vshrl.u32 %v69, 7
  %v71 = vsub.s32 0, %v70
  %v72 = vrot.slane %v58, %v71
  %v73 = vmul.f32 %v68, %v62
  %v74 = vmul.f32 %v72, %v62
  %v75 = vadd.f32 %v47, %v73
  %v76 = vadd.f32 %v48, %v74
  %v77 = vlaneseq
  %v78 = vshrl.u32 %v77, 7
  %v79 = vsub.s32 0, %v78
  %v80 = vrot.slane %v59, %v79
  %v81 = vlaneseq
  %v82 = vshrl.u32 %v81, 7
  %v83 = vsub.s32 0, %v82
  %v84 = vrot.slane %v60, %v83
  %v85 = vmul.f32 %v80, %v64
  %v86 = vmul.f32 %v84, %v64
  %v87 = vsub.f32 %v75, %v85
  %v88 = vsub.f32 %v76, %v86
  %v89 = vmul.f32 %v80, %v62
  %v90 = vmul.f32 %v84, %v62
  %v91 = vadd.f32 %v55, %v89
  %v92 = vadd.f32 %v56, %v90
  %v93 = vmul.f32 %v68, %v64
  %v94 = vmul.f32 %v72, %v64
  %v95 = vadd.f32 %v91, %v93
  %v96 = vadd.f32 %v92, %v94
  %v97 = vld [vmem:[%s0 + $0x2] sm:$0x1]
  %v98 = vld [vmem:[%s0 + $0xa] sm:$0x1]
  %v99 = vld [vmem:[%s1 + $0x2] sm:$0x1]
  %v100 = vld [vmem:[%s1 + $0xa] sm:$0x1]
  %s101 = scalar_lea.vmem %s2, 16
  %v102 = vld [vmem:[%s101] sm:$0xff]
  %s103 = scalar_lea.vmem %s3, 16
  %v104 = vld [vmem:[%s103] sm:$0xff]
  %v105 = vlaneseq
  %v106 = vshrl.u32 %v105, 7
  %v107 = vsub.s32 0, %v106
  %v108 = vrot.slane %v97, %v107
  %v109 = vlaneseq
  %v110 = vshrl.u32 %v109, 7
  %v111 = vsub.s32 0, %v110
  %v112 = vrot.slane %v98, %v111
  %v113 = vmul.f32 %v108, %v102
  %v114 = vmul.f32 %v112, %v102
  %v115 = vadd.f32 %v87, %v113
  %v116 = vadd.f32 %v88, %v114
  %v117 = vlaneseq
  %v118 = vshrl.u32 %v117, 7
  %v119 = vsub.s32 0, %v118
  %v120 = vrot.slane %v99, %v119
  %v121 = vlaneseq
  %v122 = vshrl.u32 %v121, 7
  %v123 = vsub.s32 0, %v122
  %v124 = vrot.slane %v100, %v123
  %v125 = vmul.f32 %v120, %v104
  %v126 = vmul.f32 %v124, %v104
  %v127 = vsub.f32 %v115, %v125
  %v128 = vsub.f32 %v116, %v126
  %v129 = vmul.f32 %v120, %v102
  %v130 = vmul.f32 %v124, %v102
  %v131 = vadd.f32 %v95, %v129
  %v132 = vadd.f32 %v96, %v130
  %v133 = vmul.f32 %v108, %v104
  %v134 = vmul.f32 %v112, %v104
  %v135 = vadd.f32 %v131, %v133
  %v136 = vadd.f32 %v132, %v134
  %v137 = vld [vmem:[%s0 + $0x3] sm:$0x1]
  %v138 = vld [vmem:[%s0 + $0xb] sm:$0x1]
  %v139 = vld [vmem:[%s1 + $0x3] sm:$0x1]
  %v140 = vld [vmem:[%s1 + $0xb] sm:$0x1]
  %s141 = scalar_lea.vmem %s2, 24
  %v142 = vld [vmem:[%s141] sm:$0xff]
  %s143 = scalar_lea.vmem %s3, 24
  %v144 = vld [vmem:[%s143] sm:$0xff]
  %v145 = vlaneseq
  %v146 = vshrl.u32 %v145, 7
  %v147 = vsub.s32 0, %v146
  %v148 = vrot.slane %v137, %v147
  %v149 = vlaneseq
  %v150 = vshrl.u32 %v149, 7
  %v151 = vsub.s32 0, %v150
  %v152 = vrot.slane %v138, %v151
  %v153 = vmul.f32 %v148, %v142
  %v154 = vmul.f32 %v152, %v142
  %v155 = vadd.f32 %v127, %v153
  %v156 = vadd.f32 %v128, %v154
  %v157 = vlaneseq
  %v158 = vshrl.u32 %v157, 7
  %v159 = vsub.s32 0, %v158
  %v160 = vrot.slane %v139, %v159
  %v161 = vlaneseq
  %v162 = vshrl.u32 %v161, 7
  %v163 = vsub.s32 0, %v162
  %v164 = vrot.slane %v140, %v163
  %v165 = vmul.f32 %v160, %v144
  %v166 = vmul.f32 %v164, %v144
  %v167 = vsub.f32 %v155, %v165
  %v168 = vsub.f32 %v156, %v166
  %v169 = vmul.f32 %v160, %v142
  %v170 = vmul.f32 %v164, %v142
  %v171 = vadd.f32 %v135, %v169
  %v172 = vadd.f32 %v136, %v170
  %v173 = vmul.f32 %v148, %v144
  %v174 = vmul.f32 %v152, %v144
  %v175 = vadd.f32 %v171, %v173
  %v176 = vadd.f32 %v172, %v174
  %v177 = vld [vmem:[%s0 + $0x4] sm:$0x1]
  %v178 = vld [vmem:[%s0 + $0xc] sm:$0x1]
  %v179 = vld [vmem:[%s1 + $0x4] sm:$0x1]
  %v180 = vld [vmem:[%s1 + $0xc] sm:$0x1]
  %s181 = scalar_lea.vmem %s2, 32
  %v182 = vld [vmem:[%s181] sm:$0xff]
  %s183 = scalar_lea.vmem %s3, 32
  %v184 = vld [vmem:[%s183] sm:$0xff]
  %v185 = vlaneseq
  %v186 = vshrl.u32 %v185, 7
  %v187 = vsub.s32 0, %v186
  %v188 = vrot.slane %v177, %v187
  %v189 = vlaneseq
  %v190 = vshrl.u32 %v189, 7
  %v191 = vsub.s32 0, %v190
  %v192 = vrot.slane %v178, %v191
  %v193 = vmul.f32 %v188, %v182
  %v194 = vmul.f32 %v192, %v182
  %v195 = vadd.f32 %v167, %v193
  %v196 = vadd.f32 %v168, %v194
  %v197 = vlaneseq
  %v198 = vshrl.u32 %v197, 7
  %v199 = vsub.s32 0, %v198
  %v200 = vrot.slane %v179, %v199
  %v201 = vlaneseq
  %v202 = vshrl.u32 %v201, 7
  %v203 = vsub.s32 0, %v202
  %v204 = vrot.slane %v180, %v203
  %v205 = vmul.f32 %v200, %v184
  %v206 = vmul.f32 %v204, %v184
  %v207 = vsub.f32 %v195, %v205
  %v208 = vsub.f32 %v196, %v206
  %v209 = vmul.f32 %v200, %v182
  %v210 = vmul.f32 %v204, %v182
  %v211 = vadd.f32 %v175, %v209
  %v212 = vadd.f32 %v176, %v210
  %v213 = vmul.f32 %v188, %v184
  %v214 = vmul.f32 %v192, %v184
  %v215 = vadd.f32 %v211, %v213
  %v216 = vadd.f32 %v212, %v214
  %v217 = vld [vmem:[%s0 + $0x5] sm:$0x1]
  %v218 = vld [vmem:[%s0 + $0xd] sm:$0x1]
  %v219 = vld [vmem:[%s1 + $0x5] sm:$0x1]
  %v220 = vld [vmem:[%s1 + $0xd] sm:$0x1]
  %s221 = scalar_lea.vmem %s2, 40
  %v222 = vld [vmem:[%s221] sm:$0xff]
  %s223 = scalar_lea.vmem %s3, 40
  %v224 = vld [vmem:[%s223] sm:$0xff]
  %v225 = vlaneseq
  %v226 = vshrl.u32 %v225, 7
  %v227 = vsub.s32 0, %v226
  %v228 = vrot.slane %v217, %v227
  %v229 = vlaneseq
  %v230 = vshrl.u32 %v229, 7
  %v231 = vsub.s32 0, %v230
  %v232 = vrot.slane %v218, %v231
  %v233 = vmul.f32 %v228, %v222
  %v234 = vmul.f32 %v232, %v222
  %v235 = vadd.f32 %v207, %v233
  %v236 = vadd.f32 %v208, %v234
  %v237 = vlaneseq
  %v238 = vshrl.u32 %v237, 7
  %v239 = vsub.s32 0, %v238
  %v240 = vrot.slane %v219, %v239
  %v241 = vlaneseq
  %v242 = vshrl.u32 %v241, 7
  %v243 = vsub.s32 0, %v242
  %v244 = vrot.slane %v220, %v243
  %v245 = vmul.f32 %v240, %v224
  %v246 = vmul.f32 %v244, %v224
  %v247 = vsub.f32 %v235, %v245
  %v248 = vsub.f32 %v236, %v246
  %v249 = vmul.f32 %v240, %v222
  %v250 = vmul.f32 %v244, %v222
  %v251 = vadd.f32 %v215, %v249
  %v252 = vadd.f32 %v216, %v250
  %v253 = vmul.f32 %v228, %v224
  %v254 = vmul.f32 %v232, %v224
  %v255 = vadd.f32 %v251, %v253
  %v256 = vadd.f32 %v252, %v254
  %v257 = vld [vmem:[%s0 + $0x6] sm:$0x1]
  %v258 = vld [vmem:[%s0 + $0xe] sm:$0x1]
  %v259 = vld [vmem:[%s1 + $0x6] sm:$0x1]
  %v260 = vld [vmem:[%s1 + $0xe] sm:$0x1]
  %s261 = scalar_lea.vmem %s2, 48
  %v262 = vld [vmem:[%s261] sm:$0xff]
  %s263 = scalar_lea.vmem %s3, 48
  %v264 = vld [vmem:[%s263] sm:$0xff]
  %v265 = vlaneseq
  %v266 = vshrl.u32 %v265, 7
  %v267 = vsub.s32 0, %v266
  %v268 = vrot.slane %v257, %v267
  %v269 = vlaneseq
  %v270 = vshrl.u32 %v269, 7
  %v271 = vsub.s32 0, %v270
  %v272 = vrot.slane %v258, %v271
  %v273 = vmul.f32 %v268, %v262
  %v274 = vmul.f32 %v272, %v262
  %v275 = vadd.f32 %v247, %v273
  %v276 = vadd.f32 %v248, %v274
  %v277 = vlaneseq
  %v278 = vshrl.u32 %v277, 7
  %v279 = vsub.s32 0, %v278
  %v280 = vrot.slane %v259, %v279
  %v281 = vlaneseq
  %v282 = vshrl.u32 %v281, 7
  %v283 = vsub.s32 0, %v282
  %v284 = vrot.slane %v260, %v283
  %v285 = vmul.f32 %v280, %v264
  %v286 = vmul.f32 %v284, %v264
  %v287 = vsub.f32 %v275, %v285
  %v288 = vsub.f32 %v276, %v286
  %v289 = vmul.f32 %v280, %v262
  %v290 = vmul.f32 %v284, %v262
  %v291 = vadd.f32 %v255, %v289
  %v292 = vadd.f32 %v256, %v290
  %v293 = vmul.f32 %v268, %v264
  %v294 = vmul.f32 %v272, %v264
  %v295 = vadd.f32 %v291, %v293
  %v296 = vadd.f32 %v292, %v294
  %v297 = vld [vmem:[%s0 + $0x7] sm:$0x1]
  %v298 = vld [vmem:[%s0 + $0xf] sm:$0x1]
  %v299 = vld [vmem:[%s1 + $0x7] sm:$0x1]
  %v300 = vld [vmem:[%s1 + $0xf] sm:$0x1]
  %s301 = scalar_lea.vmem %s2, 56
  %v302 = vld [vmem:[%s301] sm:$0xff]
  %s303 = scalar_lea.vmem %s3, 56
  %v304 = vld [vmem:[%s303] sm:$0xff]
  %v305 = vlaneseq
  %v306 = vshrl.u32 %v305, 7
  %v307 = vsub.s32 0, %v306
  %v308 = vrot.slane %v297, %v307
  %v309 = vlaneseq
  %v310 = vshrl.u32 %v309, 7
  %v311 = vsub.s32 0, %v310
  %v312 = vrot.slane %v298, %v311
  %v313 = vmul.f32 %v308, %v302
  %v314 = vmul.f32 %v312, %v302
  %v315 = vadd.f32 %v287, %v313
  %v316 = vadd.f32 %v288, %v314
  %v317 = vlaneseq
  %v318 = vshrl.u32 %v317, 7
  %v319 = vsub.s32 0, %v318
  %v320 = vrot.slane %v299, %v319
  %v321 = vlaneseq
  %v322 = vshrl.u32 %v321, 7
  %v323 = vsub.s32 0, %v322
  %v324 = vrot.slane %v300, %v323
  %v325 = vmul.f32 %v320, %v304
  %v326 = vmul.f32 %v324, %v304
  %v327 = vsub.f32 %v315, %v325
  %v328 = vsub.f32 %v316, %v326
  %v329 = vmul.f32 %v320, %v302
  %v330 = vmul.f32 %v324, %v302
  %v331 = vadd.f32 %v295, %v329
  %v332 = vadd.f32 %v296, %v330
  %v333 = vmul.f32 %v308, %v304
  %v334 = vmul.f32 %v312, %v304
  %v335 = vadd.f32 %v331, %v333
  %v336 = vadd.f32 %v332, %v334
  %337 = vst [vmem:[%s4] sm:$0xff] %v327
  %338 = vst [vmem:[%s4 + $0x8] sm:$0xff] %v328
  %339 = vst [vmem:[%s5] sm:$0xff] %v335
  %340 = vst [vmem:[%s5 + $0x8] sm:$0xff] %v336
  // Predicated region
  $region18: #{_spectral_conv1d_forward.1} parent=0 // pred_check
    _
  $region19: #{_spectral_conv1d_forward.1} parent=0 // pred_check_branch
    %342 = sbr.rel (0) target = $region21
  $region20: #{_spectral_conv1d_forward.1} parent=0 // pred_region
    _
  $region21: #{_spectral_conv1d_forward.1} parent=0 // pred_fallthru
    _
  // Predicated region
  $region22: #{_spectral_conv1d_forward.1} parent=0 // pred_check
    _
  $region23: #{_spectral_conv1d_forward.1} parent=0 // pred_check_branch
    %344 = sbr.rel (0) target = $region25
  $region24: #{_spectral_conv1d_forward.1} parent=0 // pred_region
    _
  $region25: #{_spectral_conv1d_forward.1} parent=0 // pred_fallthru
    _
  // Predicated region
  $region26: #{_spectral_conv1d_forward.1} parent=0 // pred_check
    _
  $region27: #{_spectral_conv1d_forward.1} parent=0 // pred_check_branch
    %346 = sbr.rel (0) target = $region29
  $region28: #{_spectral_conv1d_forward.1} parent=0 // pred_region
    _
  $region29: #{_spectral_conv1d_forward.1} parent=0 // pred_fallthru
    _
  // Predicated region
  $region30: #{_spectral_conv1d_forward.1} parent=0 // pred_check
    _
  $region31: #{_spectral_conv1d_forward.1} parent=0 // pred_check_branch
    %348 = sbr.rel (0) target = $region33
  $region32: #{_spectral_conv1d_forward.1} parent=0 // pred_region
    _
  $region33: #{_spectral_conv1d_forward.1} parent=0 // pred_fallthru
    _

</llo_original>
